<compile_context>
chip_gen: v5e
topology: v5e:2x2
jax: 0.10.0
libtpu: 0.0.40
codegen_flags: <defaults>
</compile_context>

<pallas_src>
import numpy as np
from collections import defaultdict as ddict

import jax
import jax.numpy as jnp
from jax.experimental import pallas as pl
from jax.experimental.pallas import tpu as pltpu


def _round_up(x, m):
    return ((x + m - 1) // m) * m


# ---------------------------------------------------------------------------
# Kernels
# ---------------------------------------------------------------------------
def _avg_pool_kernel_scratch(kmap_ref, knum_ref, adj_ref, x_ref, inv_ref,
                             o_ref, acc_ref):
    """acc += adj_tile @ x_tile over the (block-sparse) k axis; epilogue scales."""
    del kmap_ref  # only consumed by the index_maps
    i = pl.program_id(0)
    k = pl.program_id(2)

    @pl.when(k == 0)
    def _():
        acc_ref[...] = jnp.zeros_like(acc_ref)

    @pl.when(k < knum_ref[i])      # skip padded / all-zero adjacency k-tiles
    def _():
        acc_ref[...] += jnp.dot(adj_ref[...], x_ref[...],
                                preferred_element_type=jnp.float32)

    @pl.when(k == pl.num_programs(2) - 1)
    def _():
        o_ref[...] = (acc_ref[...] * inv_ref[...]).astype(o_ref.dtype)


def _avg_pool_kernel_inplace(kmap_ref, knum_ref, adj_ref, x_ref, inv_ref,
                             o_ref):
    """f32 output: accumulate directly into o_ref (no scratch, no epilogue copy)."""
    del kmap_ref
    i = pl.program_id(0)
    k = pl.program_id(2)

    @pl.when(k == 0)
    def _():
        o_ref[...] = jnp.zeros_like(o_ref)

    @pl.when(k < knum_ref[i])
    def _():
        o_ref[...] += jnp.dot(adj_ref[...], x_ref[...],
                              preferred_element_type=jnp.float32)

    @pl.when(k == pl.num_programs(2) - 1)
    def _():
        o_ref[...] = o_ref[...] * inv_ref[...]


# ---------------------------------------------------------------------------
# Tile planning
# ---------------------------------------------------------------------------
def _plan_tiles(num_dst, num_src, feat, op_itemsize, out_itemsize,
                use_scratch, *, tm_max=512, tn_max=1024, tk_max=1024):
    # sublane packing multiple of the MXU operand dtype (bf16 packs 16 rows/vreg)
    pack = {1: 32, 2: 16}.get(op_itemsize, 8)

    tm = min(tm_max, _round_up(num_dst, pack))
    tn = min(tn_max, _round_up(feat, 128))      # lane-dense output stores
    tk = min(tk_max, _round_up(num_src, 128))

    # v7x megacore: make sure the two "parallel" axes yield >= 2 tiles when the
    # problem is big enough, otherwise one TensorCore sits idle.
    if num_dst <= tm and feat <= tn and num_dst >= 2 * pack:
        tm = _round_up(-(-num_dst // 2), pack)

    # Explicit double-buffered VMEM budget (~40 MiB) -- safe on v7x's 64 MiB.
    def _footprint(tm_, tn_, tk_):
        return (2 * (tm_ * tk_ + tk_ * tn_) * op_itemsize   # adj + xs, 2-deep
                + 2 * tm_ * tn_ * out_itemsize               # out, 2-deep
                + (tm_ * tn_ * 4 if use_scratch else 0)      # f32 accumulator
                + 2 * tm_ * 4)                                # inv_counts

    budget = 40 << 20
    while _footprint(tm, tn, tk) > budget:
        if tk > 128:
            tk = _round_up(tk // 2, 128)
        elif tn > 128:
            tn = _round_up(tn // 2, 128)
        elif tm > pack:
            tm = _round_up(tm // 2, pack)
        else:
            break

    mp = _round_up(num_dst, tm)
    np_ = _round_up(feat, tn)
    kp = _round_up(num_src, tk)
    return tm, tn, tk, mp, np_, kp


# ---------------------------------------------------------------------------
# pallas_call wrapper
# ---------------------------------------------------------------------------
def avg_pool_pallas(kmap, knum, adj_p, xs_p, inv_p, *, tm, tn, tk,
                    num_dst, feat, out_dtype):
    """adj_p: [mp, kp] padded counts (operand dtype); xs_p: [kp, np_] padded
    features (operand dtype); inv_p: [mp, 1] f32 reciprocal counts.
    kmap: [gi, gk] int32 nonzero k-tile indices (padded by repeating the last
    valid index); knum: [gi] int32 number of valid k-tiles per dst tile.
    Returns [num_dst, feat] in out_dtype."""
    mp, kp = adj_p.shape
    np_ = xs_p.shape[1]
    gi, gj, gk = mp // tm, np_ // tn, kmap.shape[1]

    use_scratch = jnp.dtype(out_dtype) != jnp.float32
    kernel = _avg_pool_kernel_scratch if use_scratch else _avg_pool_kernel_inplace
    scratch = [pltpu.VMEM((tm, tn), jnp.float32)] if use_scratch else []

    op_itemsize = jnp.dtype(adj_p.dtype).itemsize
    out_itemsize = jnp.dtype(out_dtype).itemsize
    total_nnz_tiles = int(np.asarray(knum).sum())
    cost = pl.CostEstimate(
        flops=2 * total_nnz_tiles * tm * tk * tn * gj,
        transcendentals=0,
        bytes_accessed=(total_nnz_tiles * tm * tk * op_itemsize * gj   # adj (re-read per feat tile)
                        + total_nnz_tiles * tk * tn * op_itemsize * gj # xs (upper bound)
                        + mp * np_ * out_itemsize                      # out written once
                        + mp * 4),                                     # inv_counts
    )

    out_p = pl.pallas_call(
        kernel,
        out_shape=jax.ShapeDtypeStruct((mp, np_), out_dtype),
        grid_spec=pltpu.PrefetchScalarGridSpec(
            num_scalar_prefetch=2,
            grid=(gi, gj, gk),                       # reduction (k) axis last
            in_specs=[
                # adj tile: dst tile i, remapped nonzero k-tile
                pl.BlockSpec((tm, tk), lambda i, j, k, kmap, knum: (i, kmap[i, k])),
                # xs tile: remapped nonzero k-tile, feat tile j
                pl.BlockSpec((tk, tn), lambda i, j, k, kmap, knum: (kmap[i, k], j)),
                # reciprocal counts for dst tile i
                pl.BlockSpec((tm, 1), lambda i, j, k, kmap, knum: (i, 0)),
            ],
            out_specs=pl.BlockSpec((tm, tn), lambda i, j, k, kmap, knum: (i, j)),
            scratch_shapes=scratch,
        ),
        compiler_params=pltpu.CompilerParams(
            dimension_semantics=("parallel", "parallel", "arbitrary"),
            vmem_limit_bytes=48 << 20,   # tile plan is capped at ~40 MiB; < v7x's 64 MiB
        ),
        cost_estimate=cost,
    )(kmap, knum, adj_p, xs_p, inv_p)

    return out_p[:num_dst, :feat]


# ---------------------------------------------------------------------------
# Module-level forward (host glue around the kernel)
# ---------------------------------------------------------------------------
def pooling_layer_forward(xs, neighbor, method="avg", *, compute_dtype=None,
                          tm_max=512, tn_max=1024, tk_max=1024):
    """Mirrors PoolingLayer(method).forward(xs, neighbor).

    Returns (pooled, targets):
      pooled[r] == mean of xs[ee] over edges ee with targets[r] in neighbor[ee]
      targets   == sorted list of target ids that received >= 1 source
    (pooled is one lane-dense device array; row r corresponds to the r-th
    element of the original module's returned list.)
    """
    if method != "avg":
        raise NotImplementedError

    targets = sorted({i for ee in neighbor for i in neighbor[ee]})
    if not targets:
        return jnp.zeros((0, xs.shape[1]), dtype=xs.dtype), []

    num_dst = max(targets) + 1
    num_src, feat = xs.shape
    out_dtype = jnp.dtype(xs.dtype)

    # MXU operand dtype: bf16 for f32 inputs (f32 accumulation keeps accuracy),
    # otherwise whatever the input already is.
    if compute_dtype is None:
        op_dtype = jnp.dtype(jnp.bfloat16) if out_dtype == jnp.float32 else out_dtype
    else:
        op_dtype = jnp.dtype(compute_dtype)

    use_scratch = out_dtype != jnp.float32
    tm, tn, tk, mp, np_, kp = _plan_tiles(
        num_dst, num_src, feat, op_dtype.itemsize, out_dtype.itemsize,
        use_scratch, tm_max=tm_max, tn_max=tn_max, tk_max=tk_max)

    # Host glue: dict-of-lists -> dense count matrix built directly at the
    # padded shape (no device-side jnp.pad of the largest array).
    adj_np = np.zeros((mp, kp), dtype=np.float32)
    for ee in neighbor:
        for i in neighbor[ee]:
            adj_np[i, ee] += 1.0
    if op_dtype == jnp.bfloat16:
        assert adj_np.max() <= 256.0, "edge multiplicity too large for exact bf16 counts"

    counts = adj_np[:num_dst].sum(axis=1, keepdims=True)
    inv_np = np.zeros((mp, 1), dtype=np.float32)
    inv_np[:num_dst] = 1.0 / np.maximum(counts, 1.0)

    # Block-sparsity metadata: per dst tile, which k-tiles contain any edge.
    gi, nk = mp // tm, kp // tk
    tile_nnz = adj_np.reshape(gi, tm, nk, tk).any(axis=(1, 3))        # [gi, nk]
    knum_np = tile_nnz.sum(axis=1).astype(np.int32)                   # [gi]
    kmax = max(int(knum_np.max()), 1)
    kmap_np = np.zeros((gi, kmax), dtype=np.int32)
    for ii in range(gi):
        idxs = np.nonzero(tile_nnz[ii])[0]
        if len(idxs):
            kmap_np[ii, :len(idxs)] = idxs
            kmap_np[ii, len(idxs):] = idxs[-1]   # repeat last -> no re-DMA on padded steps

    adj = jnp.asarray(adj_np, dtype=op_dtype)                          # already padded
    xs_p = jnp.pad(xs.astype(op_dtype), ((0, kp - num_src), (0, np_ - feat)))
    inv = jnp.asarray(inv_np)
    kmap = jnp.asarray(kmap_np)
    knum = jnp.asarray(knum_np)

    dense = avg_pool_pallas(kmap, knum, adj, xs_p, inv, tm=tm, tn=tn, tk=tk,
                            num_dst=num_dst, feat=feat, out_dtype=out_dtype)

    # One device-side gather of the populated rows (sorted target order).
    pooled = jnp.take(dense, jnp.asarray(targets, dtype=jnp.int32), axis=0)
    return pooled, targets


# ---------------------------------------------------------------------------
# Self-test
# ---------------------------------------------------------------------------
if __name__ == "__main__":
    def reference(xs_np, neighbor):
        sources = ddict(list)
        for ee in neighbor:
            for i in neighbor[ee]:
                sources[i].append(xs_np[ee])
        ids, rows = [], []
        for i, xxs in sorted(sources.items(), key=lambda l: l[0]):
            ids.append(i)
            rows.append(sum(xxs) / len(xxs))
        return ids, np.stack(rows, axis=0)

    key_a, key_b = jax.random.split(jax.random.PRNGKey(0))

    # --- Test 1: tiny graph, exact f32 operand path, tight tolerance ---------
    num_src, feat = 8, 32
    xs = jax.random.normal(key_a, (num_src, feat), dtype=jnp.float32)
    neighbor = {0: [0, 1], 1: [1, 2], 2: [0, 3], 3: [3, 4],
                4: [2, 5], 5: [5, 6], 6: [6, 7], 7: [7, 0]}

    pooled, targets = pooling_layer_forward(xs, neighbor, method="avg",
                                            compute_dtype=jnp.float32)
    pooled = jax.block_until_ready(pooled)
    ref_ids, ref = reference(np.asarray(xs), neighbor)
    assert targets == ref_ids
    assert pooled.shape == ref.shape
    np.testing.assert_allclose(np.asarray(pooled), ref, rtol=1e-5, atol=1e-5)

    # --- Test 2: block-structured graph exercising the block-sparse k axis,
    #             the megacore dst split, and the default bf16 MXU path -------
    num_src2, feat2 = 288, 64
    xs2 = jax.random.normal(key_b, (num_src2, feat2), dtype=jnp.float32)
    neighbor2 = {}
    for ee in range(0, 96):          # sources 0..95   -> targets 0..31
        neighbor2[ee] = [ee % 32]
    for ee in range(192, 288):       # sources 192..287 -> targets 40..63
        neighbor2[ee] = [40 + (ee % 24)]
    # Sources 96..191 feed no target, so with tk=128 each dst tile only touches
    # its own source k-tiles and the remaining adjacency k-tiles are skipped.

    pooled2, targets2 = pooling_layer_forward(xs2, neighbor2, method="avg",
                                              tk_max=128)   # default bf16 operands
    pooled2 = jax.block_until_ready(pooled2)
    ref_ids2, ref2 = reference(np.asarray(xs2), neighbor2)
    assert targets2 == ref_ids2
    assert pooled2.shape == ref2.shape
    np.testing.assert_allclose(np.asarray(pooled2), ref2, rtol=2e-2, atol=2e-2)

    print("KERNEL_OK")
</pallas_src>

<mosaic_0001>
module attributes {stable_mosaic.version = 11 : i64} {
  func.func @_avg_pool_kernel_inplace(%arg0: i32, %arg1: i32, %arg2: i32, %arg3: memref<1x1xi32, #tpu.memory_space<smem>>, %arg4: memref<1xi32, #tpu.memory_space<smem>>, %arg5: memref<8x128xf32, #tpu.memory_space<vmem>>, %arg6: memref<128x128xf32, #tpu.memory_space<vmem>>, %arg7: memref<8x1xf32, #tpu.memory_space<vmem>>, %arg8: memref<8x128xf32, #tpu.memory_space<vmem>>) attributes {dimension_semantics = [#tpu.dimension_semantics<parallel>, #tpu.dimension_semantics<parallel>, #tpu.dimension_semantics<arbitrary>], iteration_bounds = array<i64: 1, 1, 1>, scalar_prefetch = 2 : i64, scratch_operands = 0 : i64, tpu.core_type = #tpu.core_type<tc>, window_params = [{transform_indices = @transform_0, window_bounds = array<i64: 8, 128>}, {transform_indices = @transform_1, window_bounds = array<i64: 128, 128>}, {transform_indices = @transform_2, window_bounds = array<i64: 8, 1>}, {transform_indices = @transform_3, window_bounds = array<i64: 8, 128>}]} {
    %c0_i32 = arith.constant 0 : i32
    %0 = arith.cmpi eq, %arg2, %c0_i32 : i32
    %1 = arith.extui %0 : i1 to i32
    %c0_i32_0 = arith.constant 0 : i32
    %2 = arith.cmpi ne, %1, %c0_i32_0 : i32
    scf.if %2 {
      %cst = arith.constant 0.000000e+00 : f32
      %11 = vector.broadcast %cst : f32 to vector<8x128xf32>
      %c0 = arith.constant 0 : index
      %c0_4 = arith.constant 0 : index
      %12 = vector.load %arg8[%c0, %c0_4] : memref<8x128xf32, #tpu.memory_space<vmem>>, vector<8x128xf32>
      tpu.vector_store %arg8[%c0, %c0_4], %11 {strides = array<i32>} : memref<8x128xf32, #tpu.memory_space<vmem>>, vector<8x128xf32>,
    } else {
    }
    %3 = arith.index_cast %arg0 : i32 to index
    %4 = memref.load %arg4[%3] : memref<1xi32, #tpu.memory_space<smem>>
    %5 = arith.cmpi slt, %arg2, %4 : i32
    %6 = arith.extui %5 : i1 to i32
    %c0_i32_1 = arith.constant 0 : i32
    %7 = arith.cmpi ne, %6, %c0_i32_1 : i32
    scf.if %7 {
      %c0 = arith.constant 0 : index
      %c0_4 = arith.constant 0 : index
      %11 = vector.load %arg8[%c0, %c0_4] : memref<8x128xf32, #tpu.memory_space<vmem>>, vector<8x128xf32>
      %c0_5 = arith.constant 0 : index
      %c0_6 = arith.constant 0 : index
      %12 = vector.load %arg5[%c0_5, %c0_6] : memref<8x128xf32, #tpu.memory_space<vmem>>, vector<8x128xf32>
      %c0_7 = arith.constant 0 : index
      %c0_8 = arith.constant 0 : index
      %13 = vector.load %arg6[%c0_7, %c0_8] : memref<128x128xf32, #tpu.memory_space<vmem>>, vector<128x128xf32>
      %cst = arith.constant dense<0.000000e+00> : vector<8x128xf32>
      %14 = tpu.matmul %12, %13, %cst {dimension_numbers = #tpu.dot_dimension_numbers<[1], [0], [0], [1], [0, 0, 1, 1], [], []>} : vector<8x128xf32>, vector<128x128xf32>, vector<8x128xf32> -> vector<8x128xf32>
      %15 = arith.addf %11, %14 : vector<8x128xf32>
      %c0_9 = arith.constant 0 : index
      %c0_10 = arith.constant 0 : index
      %16 = vector.load %arg8[%c0_9, %c0_10] : memref<8x128xf32, #tpu.memory_space<vmem>>, vector<8x128xf32>
      tpu.vector_store %arg8[%c0_9, %c0_10], %15 {strides = array<i32>} : memref<8x128xf32, #tpu.memory_space<vmem>>, vector<8x128xf32>,
    } else {
    }
    %c0_i32_2 = arith.constant 0 : i32
    %8 = arith.cmpi eq, %arg2, %c0_i32_2 : i32
    %9 = arith.extui %8 : i1 to i32
    %c0_i32_3 = arith.constant 0 : i32
    %10 = arith.cmpi ne, %9, %c0_i32_3 : i32
    scf.if %10 {
      %c0 = arith.constant 0 : index
      %c0_4 = arith.constant 0 : index
      %11 = vector.load %arg8[%c0, %c0_4] : memref<8x128xf32, #tpu.memory_space<vmem>>, vector<8x128xf32>
      %c0_5 = arith.constant 0 : index
      %c0_6 = arith.constant 0 : index
      %12 = vector.load %arg7[%c0_5, %c0_6] : memref<8x1xf32, #tpu.memory_space<vmem>>, vector<8x1xf32>
      %13 = vector.broadcast %12 : vector<8x1xf32> to vector<8x128xf32>
      %14 = arith.mulf %11, %13 : vector<8x128xf32>
      %c0_7 = arith.constant 0 : index
      %c0_8 = arith.constant 0 : index
      %15 = vector.load %arg8[%c0_7, %c0_8] : memref<8x128xf32, #tpu.memory_space<vmem>>, vector<8x128xf32>
      tpu.vector_store %arg8[%c0_7, %c0_8], %14 {strides = array<i32>} : memref<8x128xf32, #tpu.memory_space<vmem>>, vector<8x128xf32>,
    } else {
    }
    return
  }
  func.func @transform_0(%arg0: i32, %arg1: i32, %arg2: i32, %arg3: memref<1x1xi32, #tpu.memory_space<smem>>, %arg4: memref<1xi32, #tpu.memory_space<smem>>) -> (i32, i32) {
    %0 = arith.index_cast %arg0 : i32 to index
    %1 = arith.index_cast %arg2 : i32 to index
    %2 = memref.load %arg3[%0, %1] : memref<1x1xi32, #tpu.memory_space<smem>>
    %c0_i32 = arith.constant 0 : i32
    return %arg0, %2 : i32, i32
  }
  func.func @transform_1(%arg0: i32, %arg1: i32, %arg2: i32, %arg3: memref<1x1xi32, #tpu.memory_space<smem>>, %arg4: memref<1xi32, #tpu.memory_space<smem>>) -> (i32, i32) {
    %0 = arith.index_cast %arg0 : i32 to index
    %1 = arith.index_cast %arg2 : i32 to index
    %2 = memref.load %arg3[%0, %1] : memref<1x1xi32, #tpu.memory_space<smem>>
    %c0_i32 = arith.constant 0 : i32
    return %2, %arg1 : i32, i32
  }
  func.func @transform_2(%arg0: i32, %arg1: i32, %arg2: i32, %arg3: memref<1x1xi32, #tpu.memory_space<smem>>, %arg4: memref<1xi32, #tpu.memory_space<smem>>) -> (i32, i32) {
    %c0_i32 = arith.constant 0 : i32
    %c0_i32_0 = arith.constant 0 : i32
    return %arg0, %c0_i32 : i32, i32
  }
  func.func @transform_3(%arg0: i32, %arg1: i32, %arg2: i32, %arg3: memref<1x1xi32, #tpu.memory_space<smem>>, %arg4: memref<1xi32, #tpu.memory_space<smem>>) -> (i32, i32) {
    %c0_i32 = arith.constant 0 : i32
    return %arg0, %arg1 : i32, i32
  }
}

</mosaic_0001>

<llo_original>
// kernel: tpu_custom_call.1
$region0: #{tpu_custom_call.1}
  #allocation0 [shape = 'u32[]', space=smem, size = 0x4, offset = 0x4, fixed_abs, tag = 'smem constant byte address 0x4 - core index']
  #allocation1 [shape = 'u32[72,128]{1,0:T(1,128)}', space=vmem, size = 0x9000, scoped, tag = 'internal scratch']
  #allocation2 [shape = 's32[1]{0}', space=sflag, size = 0x4, scoped, tag = 'scoped memory for tpu_custom_call.1']
  #allocation3 [shape = 's32[1,1]{1,0:T(1,128)S(6)}', space=smem, size = 0x200, scoped, tag = 'prefetched SMEM operand 0']
  #allocation4 [shape = 's32[1]{0:T(128)S(6)}', space=smem, size = 0x200, scoped, tag = 'prefetched SMEM operand 1']
  %s0 = inlined_call_operand.<no memory space> [shape: s32[1,1], index: 0, kind: input, shape index: {}]
  %s1 = inlined_call_operand.<no memory space> [shape: s32[1], index: 1, kind: input, shape index: {}]
  %s2 = inlined_call_operand.vmem [shape: f32[8,128], index: 2, kind: input, shape index: {}]
  %s3 = inlined_call_operand.hbm [shape: f32[128,128], index: 3, kind: input, shape index: {}]
  %s4 = inlined_call_operand.vmem [shape: f32[8,1], index: 4, kind: input, shape index: {}]
  %s5 = inlined_call_operand.hbm [shape: f32[8,128], index: 5, kind: output, shape index: {}]
  %s6 = sld [smem:[#allocation0]]
  $region38: #{tpu_custom_call.1} parent=0
    _
  %s8 = ssub.s32 1, %s6
  %s9 = scalar_select 0, %s8, %s6
  %10 = sst [smem:[#allocation3]] %s0
  %11 = sst [smem:[#allocation4]] %s1
  $region1: #{tpu_custom_call.1} parent=0
    #allocation5 [shape = 'u8[65536]{0}', space=vmem, size = 0x10000, scoped, tag = 'input window, operand 3, single buffered']
    #allocation6 [shape = 's32[1]{0}', space=sflag, size = 0x4, scoped, tag = 'scoped memory for tpu_custom_call.1']
    #allocation7 [shape = 's32[1]{0}', space=sflag, size = 0x4, scoped, tag = 'scoped memory for tpu_custom_call.1']
    #allocation8 [shape = 'u8[4096]{0}', space=vmem, size = 0x1000, scoped, tag = 'output window, operand 0, single buffered']
    %12 = vsyncpa [#allocation6], 0
    %13 = vsyncpa [#allocation7], 0
    // Predicated region
    $region2: #{tpu_custom_call.1} parent=1 // pred_check
      _
    $region3: #{tpu_custom_call.1} parent=1 // pred_check_branch
      %15 = sbr.rel (0) target = $region5
    $region4: #{tpu_custom_call.1} parent=1 // pred_region
      %s16 = sadd.s32 0, 0
      %s17 = smul.u32 %s16, 128
      %s18 = sadd.s32 %s17, 0
      %s19 = sld [smem:[#allocation3 + %s18]]
      %p20 = scmp.lt.s32.totalorder %s19, 0
      %s21 = scalar_select %p20, %s19, 0
      %s22 = smul.addr %s21, 8
      %s23 = scalar_lea.vmem %s2, %s22
      %s24 = sadd.s32 0, 0
      %s25 = smul.u32 %s24, 128
      %s26 = sadd.s32 %s25, 0
      %s27 = sld [smem:[#allocation3 + %s26]]
    $region5: #{tpu_custom_call.1} parent=1 // pred_fallthru
      _
    // Predicated region
    $region6: #{tpu_custom_call.1} parent=1 // pred_check
      _
    $region7: #{tpu_custom_call.1} parent=1 // pred_check_branch
      %29 = sbr.rel (0) target = $region9
    $region8: #{tpu_custom_call.1} parent=1 // pred_region
      %s30 = sadd.s32 0, 0
      %s31 = smul.u32 %s30, 128
      %s32 = sadd.s32 %s31, 0
      %s33 = sld [smem:[#allocation3 + %s32]]
      %s34 = smul.u32 16, %s33
      %36 = vsyncadd [#allocation6], 0
      %s37 = smul.addr %s34, 8
      %s38 = scalar_lea.hbm %s3, %s37
      %s39 = sshll.u32 %s38, 4
      %s40 = int_to_ptr.hbm [resolvable:$true] %s39
      %s41 = sshll.u32 [#allocation5], 4
      %s42 = int_to_ptr.vmem [resolvable:$true] %s41
      %47 = dma.hbm_to_vmem [thread:$0]  %s40, 2048, %s42, [#allocation6], 128, 128, 8
    $region9: #{tpu_custom_call.1} parent=1 // pred_fallthru
      _
    // Predicated region
    $region10: #{tpu_custom_call.1} parent=1 // pred_check
      _
    $region11: #{tpu_custom_call.1} parent=1 // pred_check_branch
      %49 = sbr.rel (0) target = $region13
    $region12: #{tpu_custom_call.1} parent=1 // pred_region
      _
    $region13: #{tpu_custom_call.1} parent=1 // pred_fallthru
      _
    // Predicated region
    $region14: #{tpu_custom_call.1} parent=1 // pred_check
      _
    $region15: #{tpu_custom_call.1} parent=1 // pred_check_branch
      %51 = sbr.rel (0) target = $region17
    $region16: #{tpu_custom_call.1} parent=1 // pred_region
      %53 = dma.done [#allocation6], 2048
    $region17: #{tpu_custom_call.1} parent=1 // pred_fallthru
      _
    %s54 = sadd.s32 0, 0
    %s55 = smul.u32 %s54, 128
    %s56 = sadd.s32 %s55, 0
    %s57 = sld [smem:[#allocation3 + %s56]]
    %p58 = scmp.lt.s32.totalorder %s57, 0
    %s59 = scalar_select %p58, %s57, 0
    %s60 = smul.addr %s59, 8
    %s61 = scalar_lea.vmem %s2, %s60
    %s62 = sadd.s32 0, 0
    %s63 = smul.u32 %s62, 128
    %s64 = sadd.s32 %s63, 0
    %s65 = sld [smem:[#allocation3 + %s64]]
    %p66 = scmp.lt.s32.totalorder %s65, 0
    %s67 = scalar_select %p66, %s65, 0
    %s68 = smul.addr %s67, 8
    %s69 = scalar_lea.vmem %s2, %s68
    %s70 = sadd.s32 0, 0
    %s71 = smul.u32 %s70, 128
    %s72 = sadd.s32 %s71, 0
    %s73 = sld [smem:[#allocation3 + %s72]]
    %s74 = sadd.s32 0, 0
    %s75 = smul.u32 %s74, 128
    %s76 = sadd.s32 %s75, 0
    %s77 = sld [smem:[#allocation3 + %s76]]
    %s78 = smul.u32 16, %s77
    %p79 = scmp.eq.s32.totalorder 0, 0
    // Predicated region
    $region18: #{tpu_custom_call.1} parent=1 // pred_check
      %p80 = pneg %p79
    $region19: #{tpu_custom_call.1} parent=1 // pred_check_branch
      %82 = sbr.rel (%p80) target = $region21
    $region20: #{tpu_custom_call.1} parent=1 // pred_region
      %83 = vst [vmem:[#allocation8] sm:$0xff] 0.0
    $region21: #{tpu_custom_call.1} parent=1 // pred_fallthru
      _
    %s84 = sld [smem:[#allocation4]]
    %p85 = scmp.lt.s32.totalorder 0, %s84
    // Predicated region
    $region22: #{tpu_custom_call.1} parent=1 // pred_check
      %p86 = pneg %p85
    $region23: #{tpu_custom_call.1} parent=1 // pred_check_branch
      %88 = sbr.rel (%p86) target = $region25
    $region24: #{tpu_custom_call.1} parent=1 // pred_region
      %v89 = vld [vmem:[#allocation8] sm:$0xff]
      %v90 = vld [vmem:[%s69] sm:$0xff]
      %v91 = vld [vmem:[#allocation5] sm:$0xff]
      %v92 = vld [vmem:[#allocation5 + $0x8] sm:$0xff]
      %v93 = vld [vmem:[#allocation5 + $0x10] sm:$0xff]
      %v94 = vld [vmem:[#allocation5 + $0x18] sm:$0xff]
      %v95 = vld [vmem:[#allocation5 + $0x20] sm:$0xff]
      %v96 = vld [vmem:[#allocation5 + $0x28] sm:$0xff]
      %v97 = vld [vmem:[#allocation5 + $0x30] sm:$0xff]
      %v98 = vld [vmem:[#allocation5 + $0x38] sm:$0xff]
      %v99 = vld [vmem:[#allocation5 + $0x40] sm:$0xff]
      %v100 = vld [vmem:[#allocation5 + $0x48] sm:$0xff]
      %v101 = vld [vmem:[#allocation5 + $0x50] sm:$0xff]
      %v102 = vld [vmem:[#allocation5 + $0x58] sm:$0xff]
      %v103 = vld [vmem:[#allocation5 + $0x60] sm:$0xff]
      %v104 = vld [vmem:[#allocation5 + $0x68] sm:$0xff]
      %v105 = vld [vmem:[#allocation5 + $0x70] sm:$0xff]
      %v106 = vld [vmem:[#allocation5 + $0x78] sm:$0xff]
      %107 = vmatpush.msra.mxu0 %v106
      %108 = vmatpush.msra.mxu0 %v105
      %109 = vmatpush.msra.mxu0 %v104
      %110 = vmatpush.msra.mxu0 %v103
      %111 = vmatpush.msra.mxu0 %v102
      %112 = vmatpush.msra.mxu0 %v101
      %113 = vmatpush.msra.mxu0 %v100
      %114 = vmatpush.msra.mxu0 %v99
      %115 = vmatpush.msra.mxu0 %v98
      %116 = vmatpush.msra.mxu0 %v97
      %117 = vmatpush.msra.mxu0 %v96
      %118 = vmatpush.msra.mxu0 %v95
      %119 = vmatpush.msra.mxu0 %v94
      %120 = vmatpush.msra.mxu0 %v93
      %121 = vmatpush.msra.mxu0 %v92
      %122 = vmatpush.msra.mxu0 %v91
      %123 = vmatmul.f32.gmra.mxu0 %v90
      %v124 = vpop.f32.mrf.mxu0
      %v125 = vadd.f32 0.0, %v124
      %126 = vdwg.mxu0
      %v127 = vadd.f32 %v89, %v125
      %128 = vst [vmem:[#allocation8] sm:$0xff] %v127
    $region25: #{tpu_custom_call.1} parent=1 // pred_fallthru
      _
    // Predicated region
    $region26: #{tpu_custom_call.1} parent=1 // pred_check
      %p129 = pneg %p79
    $region27: #{tpu_custom_call.1} parent=1 // pred_check_branch
      %131 = sbr.rel (%p129) target = $region29
    $region28: #{tpu_custom_call.1} parent=1 // pred_region
      %v132 = vld [vmem:[#allocation8] sm:$0xff]
      %v133 = vld [vmem:[%s4] sm:$0xff]
      %135 = vset.pattern.permute.xlu0 0
      %136 = vperm.xlu0 %135, %v133
      %v137 = vpop.permute.xlu0 %136
      %v139 = vmul.f32 %v132, %v137
      %140 = vst [vmem:[#allocation8] sm:$0xff] %v139
    $region29: #{tpu_custom_call.1} parent=1 // pred_fallthru
      _
    // Predicated region
    $region30: #{tpu_custom_call.1} parent=1 // pred_check
      _
    $region31: #{tpu_custom_call.1} parent=1 // pred_check_branch
      %142 = sbr.rel (0) target = $region33
    $region32: #{tpu_custom_call.1} parent=1 // pred_region
      %144 = vsyncadd [#allocation7], 0
      %s146 = sshll.u32 [#allocation8], 4
      %s147 = int_to_ptr.vmem [resolvable:$true] %s146
      %s148 = sshll.u32 %s5, 4
      %s149 = int_to_ptr.hbm [resolvable:$true] %s148
      %151 = dma.vmem_to_hbm [thread:$0]  %s147, 128, %s149, [#allocation7]
    $region33: #{tpu_custom_call.1} parent=1 // pred_fallthru
      _
    // Predicated region
    $region34: #{tpu_custom_call.1} parent=1 // pred_check
      _
    $region35: #{tpu_custom_call.1} parent=1 // pred_check_branch
      %153 = sbr.rel (0) target = $region37
    $region36: #{tpu_custom_call.1} parent=1 // pred_region
      %155 = dma.done [#allocation7], 128
    $region37: #{tpu_custom_call.1} parent=1 // pred_fallthru
      _
    %156 = vsyncpa [#allocation6], 1
    %157 = vsyncpa [#allocation7], 1

</llo_original>
